<compile_context>
chip_gen: v5e
topology: v5e:2x2
jax: 0.10.0
libtpu: 0.0.40
codegen_flags: <defaults>
</compile_context>

<pallas_src>
import jax
import jax.numpy as jnp
from jax.experimental import pallas as pl
from jax.experimental.pallas import tpu as pltpu


def _round_up(x, m):
    return ((x + m - 1) // m) * m


def _mlp_kernel(x_ref, w1_ref, b1_ref, w2_ref, b2_ref, o_ref, acc_ref):
    k = pl.program_id(1)                      # hidden-chunk (reduction) axis

    @pl.when(k == 0)
    def _init():
        acc_ref[...] = jnp.zeros_like(acc_ref)

    # layer 1 chunk: (tile_n, in) @ (in, hid_chunk), bf16 in / f32 accumulate.
    h = jnp.dot(x_ref[...], w1_ref[...], preferred_element_type=jnp.float32)
    h = jnp.maximum(h + b1_ref[...], 0.0)     # bias + ReLU in f32 (exact per chunk)

    # layer 2 partial product, accumulated over hidden chunks in f32.
    acc_ref[...] += jnp.dot(h.astype(w2_ref.dtype), w2_ref[...],
                            preferred_element_type=jnp.float32)

    @pl.when(k == pl.num_programs(1) - 1)
    def _finalize():
        o_ref[...] = (acc_ref[...] + b2_ref[...]).astype(o_ref.dtype)


def mlp_forward(x, w1, b1, w2, b2, *, tile_n=512, hid_chunk=512, out_dtype=None):
    """x: (N, in_feats); w1: (in, hid); b1: (hid,); w2: (hid, out); b2: (out,)."""
    N, in_feats = x.shape
    hid = w1.shape[1]
    out_feats = w2.shape[1]
    out_dtype = out_dtype or x.dtype

    # Lane-dense (128-aligned) hidden / output widths; zero padding is exact
    # (padded hidden units are relu(0)=0 and hit zero rows of W2).
    hid_pad = _round_up(hid, 128)
    out_pad = _round_up(out_feats, 128)

    tile_n = min(tile_n, _round_up(N, 8))           # sublane-aligned row tile
    hid_chunk = min(hid_chunk, hid_pad)
    hid_pad = _round_up(hid_pad, hid_chunk)         # chunks tile hid_pad evenly

    bf16 = jnp.bfloat16
    xb = x.astype(bf16)
    w1p = jnp.pad(w1, ((0, 0), (0, hid_pad - hid))).astype(bf16)
    w2p = jnp.pad(w2, ((0, hid_pad - hid), (0, out_pad - out_feats))).astype(bf16)
    b1p = jnp.pad(b1, (0, hid_pad - hid)).astype(jnp.float32).reshape(1, hid_pad)
    b2p = jnp.pad(b2, (0, out_pad - out_feats)).astype(jnp.float32).reshape(1, out_pad)

    grid = (pl.cdiv(N, tile_n), hid_pad // hid_chunk)

    # VMEM budget: double-buffered tiles + single accumulator, small headroom,
    # capped at 64 MiB so it also fits v7x's smaller VMEM.
    vmem_need = (
        2 * tile_n * in_feats * 2        # x tile (bf16), double-buffered
        + 2 * tile_n * out_pad * 4       # out tile (f32), double-buffered
        + 2 * in_feats * hid_chunk * 2   # w1 chunk (bf16)
        + 2 * hid_chunk * out_pad * 2    # w2 chunk (bf16)
        + 2 * (hid_chunk + out_pad) * 4  # biases (f32)
        + tile_n * out_pad * 4           # accumulator scratch (f32)
    )
    vmem_limit = int(min(max(vmem_need + (8 << 20), 32 << 20), 64 << 20))

    cost = pl.CostEstimate(
        flops=2 * N * hid * (in_feats + out_feats),
        transcendentals=0,
        bytes_accessed=int(xb.size * 2 + w1p.size * 2 + w2p.size * 2
                           + b1p.size * 4 + b2p.size * 4 + N * out_pad * 4),
    )

    out = pl.pallas_call(
        _mlp_kernel,
        out_shape=jax.ShapeDtypeStruct((N, out_pad), out_dtype),
        grid_spec=pltpu.PrefetchScalarGridSpec(
            num_scalar_prefetch=0,
            grid=grid,
            in_specs=[
                pl.BlockSpec((tile_n, in_feats), lambda i, k: (i, 0)),   # x rows
                pl.BlockSpec((in_feats, hid_chunk), lambda i, k: (0, k)),  # W1 chunk
                pl.BlockSpec((1, hid_chunk), lambda i, k: (0, k)),         # b1 chunk
                pl.BlockSpec((hid_chunk, out_pad), lambda i, k: (k, 0)),   # W2 chunk
                pl.BlockSpec((1, out_pad), lambda i, k: (0, 0)),           # b2
            ],
            out_specs=pl.BlockSpec((tile_n, out_pad), lambda i, k: (i, 0)),
            scratch_shapes=[pltpu.VMEM((tile_n, out_pad), jnp.float32)],
        ),
        compiler_params=pltpu.CompilerParams(
            dimension_semantics=("parallel", "arbitrary"),
            vmem_limit_bytes=vmem_limit,
        ),
        cost_estimate=cost,
    )(xb, w1p, b1p, w2p, b2p)

    return out[:, :out_feats]


if __name__ == "__main__":
    key = jax.random.PRNGKey(0)
    kx, k1, k2, k3, k4 = jax.random.split(key, 5)

    # Small planetoid-like shapes.
    N, in_feats, n_units, out_feats = 8, 16, 32, 8
    x = jax.random.normal(kx, (N, in_feats), jnp.float32)

    # nn.Linear-style init, weights stored pre-transposed: (in, hid), (hid, out).
    bound1 = 1.0 / float(jnp.sqrt(float(in_feats)))
    bound2 = 1.0 / float(jnp.sqrt(float(n_units)))
    w1 = jax.random.uniform(k1, (in_feats, n_units), jnp.float32, -bound1, bound1)
    b1 = jax.random.uniform(k2, (n_units,), jnp.float32, -bound1, bound1)
    w2 = jax.random.uniform(k3, (n_units, out_feats), jnp.float32, -bound2, bound2)
    b2 = jax.random.uniform(k4, (out_feats,), jnp.float32, -bound2, bound2)

    y = mlp_forward(x, w1, b1, w2, b2)
    y = jax.block_until_ready(y)

    # Reference with matching precision (bf16 matmul inputs, f32 accumulation).
    bf16 = jnp.bfloat16
    h_ref = jnp.maximum(
        jnp.dot(x.astype(bf16), w1.astype(bf16),
                preferred_element_type=jnp.float32) + b1, 0.0)
    y_ref = jnp.dot(h_ref.astype(bf16), w2.astype(bf16),
                    preferred_element_type=jnp.float32) + b2

    assert y.shape == (N, out_feats)
    assert jnp.allclose(y, y_ref, atol=1e-4, rtol=1e-4), \
        float(jnp.max(jnp.abs(y - y_ref)))
    print("KERNEL_OK")
</pallas_src>

<mosaic_0001>
module attributes {stable_mosaic.version = 11 : i64} {
  func.func @_mlp_kernel(%arg0: i32, %arg1: i32, %arg2: memref<8x16xbf16, #tpu.memory_space<vmem>>, %arg3: memref<16x128xbf16, #tpu.memory_space<vmem>>, %arg4: memref<1x128xf32, #tpu.memory_space<vmem>>, %arg5: memref<128x128xbf16, #tpu.memory_space<vmem>>, %arg6: memref<1x128xf32, #tpu.memory_space<vmem>>, %arg7: memref<8x128xf32, #tpu.memory_space<vmem>>, %arg8: memref<8x128xf32, #tpu.memory_space<vmem>>) attributes {dimension_semantics = [#tpu.dimension_semantics<parallel>, #tpu.dimension_semantics<arbitrary>], iteration_bounds = array<i64: 1, 1>, scalar_prefetch = 0 : i64, scratch_operands = 1 : i64, tpu.core_type = #tpu.core_type<tc>, window_params = [{transform_indices = @transform_0, window_bounds = array<i64: 8, 16>}, {transform_indices = @transform_1, window_bounds = array<i64: 16, 128>}, {transform_indices = @transform_2, window_bounds = array<i64: 1, 128>}, {transform_indices = @transform_3, window_bounds = array<i64: 128, 128>}, {pipeline_mode = #tpu.pipeline_mode<synchronous>, transform_indices = @transform_4, window_bounds = array<i64: 1, 128>}, {transform_indices = @transform_5, window_bounds = array<i64: 8, 128>}]} {
    %c0_i32 = arith.constant 0 : i32
    %0 = arith.cmpi eq, %arg1, %c0_i32 : i32
    %1 = arith.extui %0 : i1 to i32
    %c0_i32_0 = arith.constant 0 : i32
    %2 = arith.cmpi ne, %1, %c0_i32_0 : i32
    scf.if %2 {
      %cst_16 = arith.constant 0.000000e+00 : f32
      %20 = vector.broadcast %cst_16 : f32 to vector<8x128xf32>
      %c0_17 = arith.constant 0 : index
      %c0_18 = arith.constant 0 : index
      %21 = vector.load %arg8[%c0_17, %c0_18] : memref<8x128xf32, #tpu.memory_space<vmem>>, vector<8x128xf32>
      tpu.vector_store %arg8[%c0_17, %c0_18], %20 {strides = array<i32>} : memref<8x128xf32, #tpu.memory_space<vmem>>, vector<8x128xf32>,
    } else {
    }
    %c0 = arith.constant 0 : index
    %c0_1 = arith.constant 0 : index
    %3 = vector.load %arg2[%c0, %c0_1] : memref<8x16xbf16, #tpu.memory_space<vmem>>, vector<8x16xbf16>
    %c0_2 = arith.constant 0 : index
    %c0_3 = arith.constant 0 : index
    %4 = vector.load %arg3[%c0_2, %c0_3] : memref<16x128xbf16, #tpu.memory_space<vmem>>, vector<16x128xbf16>
    %cst = arith.constant dense<0.000000e+00> : vector<8x128xf32>
    %5 = tpu.matmul %3, %4, %cst {dimension_numbers = #tpu.dot_dimension_numbers<[1], [0], [0], [1], [0, 0, 1, 1], [], []>} : vector<8x16xbf16>, vector<16x128xbf16>, vector<8x128xf32> -> vector<8x128xf32>
    %c0_4 = arith.constant 0 : index
    %c0_5 = arith.constant 0 : index
    %6 = vector.load %arg4[%c0_4, %c0_5] : memref<1x128xf32, #tpu.memory_space<vmem>>, vector<1x128xf32>
    %7 = vector.broadcast %6 : vector<1x128xf32> to vector<8x128xf32>
    %8 = arith.addf %5, %7 : vector<8x128xf32>
    %cst_6 = arith.constant 0.000000e+00 : f32
    %9 = vector.broadcast %cst_6 : f32 to vector<8x128xf32>
    %10 = arith.maximumf %8, %9 : vector<8x128xf32>
    %c0_7 = arith.constant 0 : index
    %c0_8 = arith.constant 0 : index
    %11 = vector.load %arg8[%c0_7, %c0_8] : memref<8x128xf32, #tpu.memory_space<vmem>>, vector<8x128xf32>
    %12 = arith.truncf %10 : vector<8x128xf32> to vector<8x128xbf16>
    %c0_9 = arith.constant 0 : index
    %c0_10 = arith.constant 0 : index
    %13 = vector.load %arg5[%c0_9, %c0_10] : memref<128x128xbf16, #tpu.memory_space<vmem>>, vector<128x128xbf16>
    %cst_11 = arith.constant dense<0.000000e+00> : vector<8x128xf32>
    %14 = tpu.matmul %12, %13, %cst_11 {dimension_numbers = #tpu.dot_dimension_numbers<[1], [0], [0], [1], [0, 0, 1, 1], [], []>} : vector<8x128xbf16>, vector<128x128xbf16>, vector<8x128xf32> -> vector<8x128xf32>
    %15 = arith.addf %11, %14 : vector<8x128xf32>
    %c0_12 = arith.constant 0 : index
    %c0_13 = arith.constant 0 : index
    %16 = vector.load %arg8[%c0_12, %c0_13] : memref<8x128xf32, #tpu.memory_space<vmem>>, vector<8x128xf32>
    tpu.vector_store %arg8[%c0_12, %c0_13], %15 {strides = array<i32>} : memref<8x128xf32, #tpu.memory_space<vmem>>, vector<8x128xf32>,
    %c0_i32_14 = arith.constant 0 : i32
    %17 = arith.cmpi eq, %arg1, %c0_i32_14 : i32
    %18 = arith.extui %17 : i1 to i32
    %c0_i32_15 = arith.constant 0 : i32
    %19 = arith.cmpi ne, %18, %c0_i32_15 : i32
    scf.if %19 {
      %c0_16 = arith.constant 0 : index
      %c0_17 = arith.constant 0 : index
      %20 = vector.load %arg8[%c0_16, %c0_17] : memref<8x128xf32, #tpu.memory_space<vmem>>, vector<8x128xf32>
      %c0_18 = arith.constant 0 : index
      %c0_19 = arith.constant 0 : index
      %21 = vector.load %arg6[%c0_18, %c0_19] : memref<1x128xf32, #tpu.memory_space<vmem>>, vector<1x128xf32>
      %22 = vector.broadcast %21 : vector<1x128xf32> to vector<8x128xf32>
      %23 = arith.addf %20, %22 : vector<8x128xf32>
      %c0_20 = arith.constant 0 : index
      %c0_21 = arith.constant 0 : index
      %24 = vector.load %arg7[%c0_20, %c0_21] : memref<8x128xf32, #tpu.memory_space<vmem>>, vector<8x128xf32>
      tpu.vector_store %arg7[%c0_20, %c0_21], %23 {strides = array<i32>} : memref<8x128xf32, #tpu.memory_space<vmem>>, vector<8x128xf32>,
    } else {
    }
    return
  }
  func.func @transform_0(%arg0: i32, %arg1: i32) -> (i32, i32) {
    %c0_i32 = arith.constant 0 : i32
    %c0_i32_0 = arith.constant 0 : i32
    return %arg0, %c0_i32 : i32, i32
  }
  func.func @transform_1(%arg0: i32, %arg1: i32) -> (i32, i32) {
    %c0_i32 = arith.constant 0 : i32
    %c0_i32_0 = arith.constant 0 : i32
    return %c0_i32, %arg1 : i32, i32
  }
  func.func @transform_2(%arg0: i32, %arg1: i32) -> (i32, i32) {
    %c0_i32 = arith.constant 0 : i32
    %c0_i32_0 = arith.constant 0 : i32
    return %c0_i32, %arg1 : i32, i32
  }
  func.func @transform_3(%arg0: i32, %arg1: i32) -> (i32, i32) {
    %c0_i32 = arith.constant 0 : i32
    %c0_i32_0 = arith.constant 0 : i32
    return %arg1, %c0_i32 : i32, i32
  }
  func.func @transform_4(%arg0: i32, %arg1: i32) -> (i32, i32) {
    %c0_i32 = arith.constant 0 : i32
    %c0_i32_0 = arith.constant 0 : i32
    %c0_i32_1 = arith.constant 0 : i32
    return %c0_i32, %c0_i32_0 : i32, i32
  }
  func.func @transform_5(%arg0: i32, %arg1: i32) -> (i32, i32) {
    %c0_i32 = arith.constant 0 : i32
    %c0_i32_0 = arith.constant 0 : i32
    return %arg0, %c0_i32 : i32, i32
  }
}

</mosaic_0001>

<llo_original>
// kernel: tpu_custom_call.1
$region0: #{tpu_custom_call.1}
  #allocation0 [shape = 'u32[]', space=smem, size = 0x4, offset = 0x4, fixed_abs, tag = 'smem constant byte address 0x4 - core index']
  #allocation1 [shape = 'u32[72,128]{1,0:T(1,128)}', space=vmem, size = 0x9000, scoped, tag = 'internal scratch']
  #allocation2 [shape = 'f32[8,128]{1,0:T(8,128)}', space=vmem, size = 0x1000, scoped, tag = 'scratch operand']
  %s0 = inlined_call_operand.hbm [shape: bf16[8,16], index: 0, kind: input, shape index: {}]
  %s1 = inlined_call_operand.hbm [shape: bf16[16,128], index: 1, kind: input, shape index: {}]
  %s2 = inlined_call_operand.vmem [shape: f32[1,128], index: 2, kind: input, shape index: {}]
  %s3 = inlined_call_operand.hbm [shape: bf16[128,128], index: 3, kind: input, shape index: {}]
  %s4 = inlined_call_operand.vmem [shape: f32[1,128], index: 4, kind: input, shape index: {}]
  %s5 = inlined_call_operand.hbm [shape: f32[8,128], index: 5, kind: output, shape index: {}]
  %s6 = sld [smem:[#allocation0]]
  $region50: #{tpu_custom_call.1} parent=0
    _
  %s8 = ssub.s32 1, %s6
  %s9 = scalar_select 0, %s8, %s6
  $region1: #{tpu_custom_call.1} parent=0
    #allocation3 [shape = 'u8[2048]{0}', space=vmem, size = 0x800, scoped, tag = 'input window, operand 0, single buffered']
    #allocation4 [shape = 's32[1]{0}', space=sflag, size = 0x4, scoped, tag = 'scoped memory for tpu_custom_call.1']
    #allocation5 [shape = 's32[1]{0}', space=sflag, size = 0x4, scoped, tag = 'scoped memory for tpu_custom_call.1']
    #allocation6 [shape = 'u8[4096]{0}', space=vmem, size = 0x1000, scoped, tag = 'input window, operand 1, single buffered']
    #allocation7 [shape = 's32[1]{0}', space=sflag, size = 0x4, scoped, tag = 'scoped memory for tpu_custom_call.1']
    #allocation8 [shape = 'u8[32768]{0}', space=vmem, size = 0x8000, scoped, tag = 'input window, operand 3, single buffered']
    #allocation9 [shape = 'u8[4096]{0}', space=vmem, size = 0x1000, scoped, tag = 'output window, operand 0, single buffered']
    %10 = vsyncpa [#allocation4], 0
    %11 = vsyncpa [#allocation7], 0
    %12 = vsyncpa [#allocation5], 0
    // Predicated region
    $region2: #{tpu_custom_call.1} parent=1 // pred_check
      _
    $region3: #{tpu_custom_call.1} parent=1 // pred_check_branch
      %14 = sbr.rel (0) target = $region5
    $region4: #{tpu_custom_call.1} parent=1 // pred_region
      %16 = vsyncadd [#allocation4], 0
      %s18 = sshll.u32 %s0, 4
      %s19 = int_to_ptr.hbm [resolvable:$true] %s18
      %s20 = sshll.u32 [#allocation3], 4
      %s21 = int_to_ptr.vmem [resolvable:$true] %s20
      %23 = dma.hbm_to_vmem [thread:$0]  %s19, 64, %s21, [#allocation4]
    $region5: #{tpu_custom_call.1} parent=1 // pred_fallthru
      _
    // Predicated region
    $region6: #{tpu_custom_call.1} parent=1 // pred_check
      _
    $region7: #{tpu_custom_call.1} parent=1 // pred_check_branch
      %25 = sbr.rel (0) target = $region9
    $region8: #{tpu_custom_call.1} parent=1 // pred_region
      %27 = vsyncadd [#allocation7], 0
      %s28 = sshll.u32 %s1, 4
      %s29 = int_to_ptr.hbm [resolvable:$true] %s28
      %s30 = sshll.u32 [#allocation6], 4
      %s31 = int_to_ptr.vmem [resolvable:$true] %s30
      %36 = dma.hbm_to_vmem [thread:$0]  %s29, 128, %s31, [#allocation7], 64, 64, 4
    $region9: #{tpu_custom_call.1} parent=1 // pred_fallthru
      _
    // Predicated region
    $region10: #{tpu_custom_call.1} parent=1 // pred_check
      _
    $region11: #{tpu_custom_call.1} parent=1 // pred_check_branch
      %38 = sbr.rel (0) target = $region13
    $region12: #{tpu_custom_call.1} parent=1 // pred_region
      _
    $region13: #{tpu_custom_call.1} parent=1 // pred_fallthru
      _
    // Predicated region
    $region14: #{tpu_custom_call.1} parent=1 // pred_check
      _
    $region15: #{tpu_custom_call.1} parent=1 // pred_check_branch
      %40 = sbr.rel (0) target = $region17
    $region16: #{tpu_custom_call.1} parent=1 // pred_region
      %42 = vsyncadd [#allocation7], 0
      %s43 = sshll.u32 %s3, 4
      %s44 = int_to_ptr.hbm [resolvable:$true] %s43
      %s45 = sshll.u32 [#allocation8], 4
      %s46 = int_to_ptr.vmem [resolvable:$true] %s45
      %51 = dma.hbm_to_vmem [thread:$0]  %s44, 1024, %s46, [#allocation7], 64, 64, 4
    $region17: #{tpu_custom_call.1} parent=1 // pred_fallthru
      _
    // Predicated region
    $region18: #{tpu_custom_call.1} parent=1 // pred_check
      _
    $region19: #{tpu_custom_call.1} parent=1 // pred_check_branch
      %53 = sbr.rel (0) target = $region21
    $region20: #{tpu_custom_call.1} parent=1 // pred_region
      _
    $region21: #{tpu_custom_call.1} parent=1 // pred_fallthru
      _
    // Predicated region
    $region22: #{tpu_custom_call.1} parent=1 // pred_check
      _
    $region23: #{tpu_custom_call.1} parent=1 // pred_check_branch
      %55 = sbr.rel (0) target = $region25
    $region24: #{tpu_custom_call.1} parent=1 // pred_region
      %57 = dma.done [#allocation4], 64
    $region25: #{tpu_custom_call.1} parent=1 // pred_fallthru
      _
    // Predicated region
    $region26: #{tpu_custom_call.1} parent=1 // pred_check
      _
    $region27: #{tpu_custom_call.1} parent=1 // pred_check_branch
      %59 = sbr.rel (0) target = $region29
    $region28: #{tpu_custom_call.1} parent=1 // pred_region
      %61 = dma.done [#allocation7], 128
    $region29: #{tpu_custom_call.1} parent=1 // pred_fallthru
      _
    // Predicated region
    $region30: #{tpu_custom_call.1} parent=1 // pred_check
      _
    $region31: #{tpu_custom_call.1} parent=1 // pred_check_branch
      %63 = sbr.rel (0) target = $region33
    $region32: #{tpu_custom_call.1} parent=1 // pred_region
      %65 = dma.done [#allocation7], 1024
    $region33: #{tpu_custom_call.1} parent=1 // pred_fallthru
      _
    %p67 = scmp.eq.s32.totalorder 0, 0
    // Predicated region
    $region34: #{tpu_custom_call.1} parent=1 // pred_check
      %p68 = pneg %p67
    $region35: #{tpu_custom_call.1} parent=1 // pred_check_branch
      %70 = sbr.rel (%p68) target = $region37
    $region36: #{tpu_custom_call.1} parent=1 // pred_region
      %71 = vst [vmem:[#allocation2] sm:$0xff] 0.0
    $region37: #{tpu_custom_call.1} parent=1 // pred_fallthru
      _
    %v72 = vld [vmem:[#allocation3] sm:$0xf]
    %v73 = vld [vmem:[#allocation6] sm:$0xf]
    %v74 = vld [vmem:[#allocation6 + $0x4] sm:$0xf]
    %v75 = vld [vmem:[%s2] sm:$0x1]
    %v77 = vperm.slane %v75, 0
    %v81 = vunpack.c.l.b16 %v73
    %v82 = vunpack.c.l.b16 %v74
    %v83 = vpack.c.b16 %v82, %v81
    %vm85 = vcmask 130048
    %v87 = vsel %vm85, %v72, 0
    %89 = vmatpush.bf16.msra.mxu0 0
    %90 = vmatpush.bf16.msra.mxu0 0
    %91 = vmatpush.bf16.msra.mxu0 0
    %92 = vmatpush.bf16.msra.mxu0 0
    %93 = vmatpush.bf16.msra.mxu0 0
    %94 = vmatpush.bf16.msra.mxu0 0
    %95 = vmatpush.bf16.msra.mxu0 0
    %96 = vmatpush.bf16.msra.mxu0 %v83
    %97 = vmatmul.bf16.gmra.mxu0 %v87
    %v98 = vpop.f32.mrf.mxu0
    %v99 = vadd.f32 %v77, %v98
    %v100 = vpop.f32.mrf.mxu0
    %101 = vdwg.mxu0
    %v102 = vmax.f32 %v99, 0.0
    %v103 = vld [vmem:[#allocation2] sm:$0xff]
    %v104 = vpack.c.bf16 %v102, %v102
    %v105 = vld [vmem:[#allocation8] sm:$0xf]
    %v106 = vld [vmem:[#allocation8 + $0x4] sm:$0xf]
    %v107 = vld [vmem:[#allocation8 + $0x8] sm:$0xf]
    %v108 = vld [vmem:[#allocation8 + $0xc] sm:$0xf]
    %v109 = vld [vmem:[#allocation8 + $0x10] sm:$0xf]
    %v110 = vld [vmem:[#allocation8 + $0x14] sm:$0xf]
    %v111 = vld [vmem:[#allocation8 + $0x18] sm:$0xf]
    %v112 = vld [vmem:[#allocation8 + $0x1c] sm:$0xf]
    %v113 = vld [vmem:[#allocation8 + $0x20] sm:$0xf]
    %v114 = vld [vmem:[#allocation8 + $0x24] sm:$0xf]
    %v115 = vld [vmem:[#allocation8 + $0x28] sm:$0xf]
    %v116 = vld [vmem:[#allocation8 + $0x2c] sm:$0xf]
    %v117 = vld [vmem:[#allocation8 + $0x30] sm:$0xf]
    %v118 = vld [vmem:[#allocation8 + $0x34] sm:$0xf]
    %v119 = vld [vmem:[#allocation8 + $0x38] sm:$0xf]
    %v120 = vld [vmem:[#allocation8 + $0x3c] sm:$0xf]
    %v137 = vunpack.c.l.b16 %v105
    %v138 = vunpack.c.l.b16 %v106
    %v139 = vunpack.c.l.b16 %v107
    %v140 = vunpack.c.l.b16 %v108
    %v141 = vunpack.c.l.b16 %v109
    %v142 = vunpack.c.l.b16 %v110
    %v143 = vunpack.c.l.b16 %v111
    %v144 = vunpack.c.l.b16 %v112
    %v145 = vunpack.c.l.b16 %v113
    %v146 = vunpack.c.l.b16 %v114
    %v147 = vunpack.c.l.b16 %v115
    %v148 = vunpack.c.l.b16 %v116
    %v149 = vunpack.c.l.b16 %v117
    %v150 = vunpack.c.l.b16 %v118
    %v151 = vunpack.c.l.b16 %v119
    %v152 = vunpack.c.l.b16 %v120
    %v153 = vpack.c.b16 %v138, %v137
    %v154 = vpack.c.b16 %v140, %v139
    %v155 = vpack.c.b16 %v142, %v141
    %v156 = vpack.c.b16 %v144, %v143
    %v157 = vpack.c.b16 %v146, %v145
    %v158 = vpack.c.b16 %v148, %v147
    %v159 = vpack.c.b16 %v150, %v149
    %v160 = vpack.c.b16 %v152, %v151
    %169 = vmatpush.bf16.msra.mxu0 %v160
    %170 = vmatpush.bf16.msra.mxu0 %v159
    %171 = vmatpush.bf16.msra.mxu0 %v158
    %172 = vmatpush.bf16.msra.mxu0 %v157
    %173 = vmatpush.bf16.msra.mxu0 %v156
    %174 = vmatpush.bf16.msra.mxu0 %v155
    %175 = vmatpush.bf16.msra.mxu0 %v154
    %176 = vmatpush.bf16.msra.mxu0 %v153
    %177 = vmatmul.bf16.gmra.mxu0 %v104
    %v178 = vpop.f32.mrf.mxu0
    %v179 = vadd.f32 0.0, %v178
    %v180 = vpop.f32.mrf.mxu0
    %181 = vdwg.mxu0
    %v182 = vadd.f32 %v103, %v179
    %183 = vst [vmem:[#allocation2] sm:$0xff] %v182
    // Predicated region
    $region38: #{tpu_custom_call.1} parent=1 // pred_check
      %p184 = pneg %p67
    $region39: #{tpu_custom_call.1} parent=1 // pred_check_branch
      %186 = sbr.rel (%p184) target = $region41
    $region40: #{tpu_custom_call.1} parent=1 // pred_region
      %v187 = vld [vmem:[#allocation2] sm:$0xff]
      %v188 = vld [vmem:[%s4] sm:$0x1]
      %v190 = vperm.slane %v188, 0
      %v192 = vadd.f32 %v187, %v190
      %193 = vst [vmem:[#allocation9] sm:$0xff] %v192
    $region41: #{tpu_custom_call.1} parent=1 // pred_fallthru
      _
    // Predicated region
    $region42: #{tpu_custom_call.1} parent=1 // pred_check
      _
    $region43: #{tpu_custom_call.1} parent=1 // pred_check_branch
      %195 = sbr.rel (0) target = $region45
    $region44: #{tpu_custom_call.1} parent=1 // pred_region
      %197 = vsyncadd [#allocation5], 0
      %s199 = sshll.u32 [#allocation9], 4
      %s200 = int_to_ptr.vmem [resolvable:$true] %s199
      %s201 = sshll.u32 %s5, 4
      %s202 = int_to_ptr.hbm [resolvable:$true] %s201
      %204 = dma.vmem_to_hbm [thread:$0]  %s200, 128, %s202, [#allocation5]
    $region45: #{tpu_custom_call.1} parent=1 // pred_fallthru
      _
    // Predicated region
    $region46: #{tpu_custom_call.1} parent=1 // pred_check
      _
    $region47: #{tpu_custom_call.1} parent=1 // pred_check_branch
      %206 = sbr.rel (0) target = $region49
    $region48: #{tpu_custom_call.1} parent=1 // pred_region
      %208 = dma.done [#allocation5], 128
    $region49: #{tpu_custom_call.1} parent=1 // pred_fallthru
      _
    %209 = vsyncpa [#allocation4], 1
    %210 = vsyncpa [#allocation7], 1
    %211 = vsyncpa [#allocation5], 1

</llo_original>
